<compile_context>
chip_gen: v7x
topology: tpu7x:2x2x1
jax: 0.10.0
libtpu: 0.0.40
codegen_flags: <defaults>
</compile_context>

<pallas_src>
import jax
import jax.numpy as jnp
from jax.experimental import pallas as pl
from jax.experimental.pallas import tpu as pltpu

LANES = 128
_TARGET_BLOCK_BYTES = 2 * 1024 * 1024  # ~2 MiB input block (native dtype)


def _scalable_tanh_kernel(x_ref, s_ref, o_ref):
    # x_ref: (TM, L) in native dtype, s_ref: (1, L) f32 scale (lane-aligned),
    # o_ref: (TM, L) in native dtype.  Math in f32 in-register.
    xf = x_ref[...].astype(jnp.float32)
    o_ref[...] = (s_ref[...] * jnp.tanh(xf)).astype(o_ref.dtype)


def _pick_tile_rows(rows, lane_width, itemsize):
    """Row-tile size: ~2 MiB native-dtype blocks, multiple of 8 sublanes."""
    tm = _TARGET_BLOCK_BYTES // (lane_width * itemsize)
    tm = max(8, min(tm, 8192))
    tm = (tm // 8) * 8
    if tm >= rows:
        return rows  # single block == full array dims (any row count is legal)
    return tm


@jax.jit
def scalable_tanh(x, scale):
    """out = scale * tanh(x);  scale.shape == (x.shape[-1],)."""
    orig_shape = x.shape
    h = scale.shape[-1]
    assert x.shape[-1] == h, (x.shape, scale.shape)

    scale_f32 = scale.astype(jnp.float32)
    total = x.size
    n_rows = total // h  # number of feature rows (all leading dims folded)
    x2 = x.reshape(n_rows, h)

    # --- Pack/pad so the lane dim is always a multiple of 128 (lane-dense) ---
    if h % LANES == 0:
        # Features already lane-dense.
        lane_w = h
        rows = n_rows
        xp = x2
        sp = scale_f32.reshape(1, lane_w)
        row_pad = 0
        mode = "direct"
    elif LANES % h == 0:
        # Pack k consecutive feature rows into one 128-lane row; tile scale.
        k = LANES // h
        row_pad = (-n_rows) % k
        xp = jnp.pad(x2, ((0, row_pad), (0, 0))) if row_pad else x2
        rows = (n_rows + row_pad) // k
        xp = xp.reshape(rows, LANES)
        sp = jnp.tile(scale_f32, k).reshape(1, LANES)
        lane_w = LANES
        mode = "packed"
    else:
        # Pad the feature dim up to the next multiple of 128 (slice after).
        lane_w = ((h + LANES - 1) // LANES) * LANES
        xp = jnp.pad(x2, ((0, 0), (0, lane_w - h)))
        sp = jnp.pad(scale_f32, (0, lane_w - h)).reshape(1, lane_w)
        rows = n_rows
        row_pad = 0
        mode = "featpad"

    tm = _pick_tile_rows(rows, lane_w, xp.dtype.itemsize)
    grid = (pl.cdiv(rows, tm),)

    out = pl.pallas_call(
        _scalable_tanh_kernel,
        out_shape=jax.ShapeDtypeStruct((rows, lane_w), x.dtype),
        grid=grid,
        in_specs=[
            pl.BlockSpec((tm, lane_w), lambda i: (i, 0)),
            pl.BlockSpec((1, lane_w), lambda i: (0, 0)),  # resident scale
        ],
        out_specs=pl.BlockSpec((tm, lane_w), lambda i: (i, 0)),
        compiler_params=pltpu.CompilerParams(
            dimension_semantics=("parallel",),
        ),
    )(xp, sp)

    # --- Undo packing/padding ---
    if mode == "packed":
        out = out.reshape(n_rows + row_pad, h)[:n_rows]
    elif mode == "featpad":
        out = out[:, :h]
    return out.reshape(orig_shape)


class ScalableTanhPallas:
    """JAX/Pallas equivalent of model/layers.py::ScalableTanh.

    `scale` is initialized to zeros (matching torch's nn.Parameter init), so a
    freshly constructed module returns zeros; assign `.scale` to change it.
    """

    def __init__(self, input_size):
        self.scale = jnp.zeros((input_size,), dtype=jnp.float32)

    def __call__(self, x):
        return scalable_tanh(x, self.scale)


def _reference(x, scale):
    return (scale * jnp.tanh(x.astype(jnp.float32))).astype(x.dtype)


if __name__ == "__main__":
    key = jax.random.PRNGKey(0)
    kx, ks, kx2, ks2 = jax.random.split(key, 4)

    # Main check: batch=2, seq=8, hidden=32 (lane-packing path, f32).
    batch, seq, hidden = 2, 8, 32
    x = jax.random.normal(kx, (batch, seq, hidden), dtype=jnp.float32)

    model = ScalableTanhPallas(hidden)

    # 1) default (zero) scale -> output must be exactly zero, like torch init.
    out0 = jax.block_until_ready(model(x))
    assert out0.shape == x.shape, out0.shape
    assert jnp.allclose(out0, jnp.zeros_like(x)), float(jnp.max(jnp.abs(out0)))

    # 2) non-trivial scale -> check against the pure-JAX reference.
    model.scale = jax.random.normal(ks, (hidden,), dtype=jnp.float32)
    out = jax.block_until_ready(model(x))
    ref = jax.block_until_ready(_reference(x, model.scale))
    assert jnp.allclose(out, ref, atol=1e-5, rtol=1e-5), float(
        jnp.max(jnp.abs(out - ref))
    )

    # 3) odd feature width (feature-pad path) + bf16 I/O (native-dtype kernel).
    h2 = 48
    xb = jax.random.normal(kx2, (3, 7, h2), dtype=jnp.bfloat16)
    sb = jax.random.normal(ks2, (h2,), dtype=jnp.float32)
    out_b = jax.block_until_ready(scalable_tanh(xb, sb))
    ref_b = jax.block_until_ready(_reference(xb, sb))
    assert out_b.dtype == xb.dtype and out_b.shape == xb.shape
    assert jnp.allclose(
        out_b.astype(jnp.float32), ref_b.astype(jnp.float32), atol=2e-2, rtol=2e-2
    ), float(jnp.max(jnp.abs(out_b.astype(jnp.float32) - ref_b.astype(jnp.float32))))

    print("KERNEL_OK")
</pallas_src>

<mosaic_0001>
module attributes {stable_mosaic.version = 11 : i64} {
  func.func @_scalable_tanh_kernel(%arg0: i32, %arg1: memref<4x128xf32, #tpu.memory_space<vmem>>, %arg2: memref<1x128xf32, #tpu.memory_space<vmem>>, %arg3: memref<4x128xf32, #tpu.memory_space<vmem>>) attributes {dimension_semantics = [#tpu.dimension_semantics<parallel>], iteration_bounds = array<i64: 1>, scalar_prefetch = 0 : i64, scratch_operands = 0 : i64, tpu.core_type = #tpu.core_type<tc>, window_params = [{transform_indices = @transform_0, window_bounds = array<i64: 4, 128>}, {pipeline_mode = #tpu.pipeline_mode<synchronous>, transform_indices = @transform_1, window_bounds = array<i64: 1, 128>}, {transform_indices = @transform_2, window_bounds = array<i64: 4, 128>}]} {
    %c0 = arith.constant 0 : index
    %c0_0 = arith.constant 0 : index
    %0 = vector.load %arg1[%c0, %c0_0] : memref<4x128xf32, #tpu.memory_space<vmem>>, vector<4x128xf32>
    %c0_1 = arith.constant 0 : index
    %c0_2 = arith.constant 0 : index
    %1 = vector.load %arg2[%c0_1, %c0_2] : memref<1x128xf32, #tpu.memory_space<vmem>>, vector<1x128xf32>
    %2 = math.tanh %0 : vector<4x128xf32>
    %3 = vector.broadcast %1 : vector<1x128xf32> to vector<4x128xf32>
    %4 = arith.mulf %3, %2 : vector<4x128xf32>
    %c0_3 = arith.constant 0 : index
    %c0_4 = arith.constant 0 : index
    %5 = vector.load %arg3[%c0_3, %c0_4] : memref<4x128xf32, #tpu.memory_space<vmem>>, vector<4x128xf32>
    tpu.vector_store %arg3[%c0_3, %c0_4], %4 {strides = array<i32>} : memref<4x128xf32, #tpu.memory_space<vmem>>, vector<4x128xf32>,
    return
  }
  func.func @transform_0(%arg0: i32) -> (i32, i32) {
    %c0_i32 = arith.constant 0 : i32
    %c0_i32_0 = arith.constant 0 : i32
    return %arg0, %c0_i32 : i32, i32
  }
  func.func @transform_1(%arg0: i32) -> (i32, i32) {
    %c0_i32 = arith.constant 0 : i32
    %c0_i32_0 = arith.constant 0 : i32
    %c0_i32_1 = arith.constant 0 : i32
    return %c0_i32, %c0_i32_0 : i32, i32
  }
  func.func @transform_2(%arg0: i32) -> (i32, i32) {
    %c0_i32 = arith.constant 0 : i32
    %c0_i32_0 = arith.constant 0 : i32
    return %arg0, %c0_i32 : i32, i32
  }
}

</mosaic_0001>

<llo_original>
// kernel: tile.9
$region0: #{tile.9}
  %s0 = inlined_call_operand.vmem [shape: f32[4,32], index: 0, kind: input, shape index: {}]
  %s1 = inlined_call_operand.vmem [shape: f32[1,128], index: 1, kind: output, shape index: {}]
  $region1: #{tile.9} parent=0
    #allocation0 [shape = 'u8[4096]{0}', space=vmem, size = 0x1000, scoped, tag = 'scoped mem for output reshape']
    #allocation1 [shape = 'u8[4096]{0}', space=vmem, size = 0x1000, scoped, tag = 'scoped mem for input reshape']
    %s3 = sshllo.u32 0, 4
    %v4 = vld [vmem:[%s0] sm:%s3]
    %5 = vst [vmem:[#allocation1] sm:%s3] %v4
    %v6 = vld [vmem:[#allocation1] sm:$0x1]
    %vm7 = vcmask 261120
    %8 = vst.msk [vmem:[#allocation0] sm:$0x1] %vm7, %v6
    %s9 = scalar_lea.vmem [#allocation1], 3
    %v10 = vld [vmem:[%s9] sm:$0x1]
    %11 = vrot.lane.b32.xlu0 %v10, 96
    %v12 = vpop.permute.xlu0 %11
    %vm13 = vcmask 1048320
    %14 = vst.msk [vmem:[#allocation0] sm:$0x1] %vm13, %v12
    %s15 = scalar_lea.vmem [#allocation1], 2
    %v16 = vld [vmem:[%s15] sm:$0x1]
    %17 = vrot.lane.b32.xlu0 %v16, 64
    %v18 = vpop.permute.xlu0 %17
    %vm19 = vcmask 785920
    %20 = vst.msk [vmem:[#allocation0] sm:$0x1] %vm19, %v18
    %s21 = scalar_lea.vmem [#allocation1], 1
    %v22 = vld [vmem:[%s21] sm:$0x1]
    %23 = vrot.lane.b32.xlu0 %v22, 32
    %v24 = vpop.permute.xlu0 %23
    %vm25 = vcmask 523520
    %26 = vst.msk [vmem:[#allocation0] sm:$0x1] %vm25, %v24
    %s28 = sshllo.u32 0, 1
    %v30 = vld [vmem:[#allocation0] sm:%s28]
    %s31 = sshllo.u32 0, 1
    %32 = vst [vmem:[%s1] sm:%s31] %v30

// kernel: tile.8
$region0: #{tile.8}
  #allocation0 [shape = 's32[1]{0}', space=sflag, size = 0x4, scoped, tag = 'scoped memory for tile.8']
  %s0 = inlined_call_operand.vmem [shape: f32[32], index: 0, kind: input, shape index: {}]
  %s1 = inlined_call_operand.vmem [shape: f32[4,32], index: 1, kind: output, shape index: {}]
  // Predicated region
  $region2: #{tile.8} parent=0 // pred_check
    _
  $region3: #{tile.8} parent=0 // pred_check_branch
    %3 = sbr.rel (0) target = $region5
  $region4: #{tile.8} parent=0 // pred_region
    _
  $region5: #{tile.8} parent=0 // pred_fallthru
    _
  %v4 = vld [vmem:[%s0] ss:$0 sm:$0xff]
  %5 = vst [vmem:[%s1] sm:$0xf] %v4

// kernel: scalable_tanh.1
$region0: #{scalable_tanh.1}
  #allocation0 [shape = 'u32[]', space=smem, size = 0x4, offset = 0x4, fixed_abs, tag = 'smem constant byte address 0x4 - core index']
  #allocation1 [shape = 'u32[144,128]{1,0:T(1,128)}', space=vmem, size = 0x12000, scoped, tag = 'internal scratch']
  %s0 = inlined_call_operand.vmem [shape: f32[4,128], index: 0, kind: input, shape index: {}]
  %s1 = inlined_call_operand.vmem [shape: f32[1,128], index: 1, kind: input, shape index: {}]
  %s2 = inlined_call_operand.vmem [shape: f32[4,128], index: 2, kind: output, shape index: {}]
  %s3 = sld [smem:[#allocation0]]
  $region18: #{scalable_tanh.1} parent=0
    _
  %s5 = ssub.s32 1, %s3
  %s6 = scalar_select 0, %s5, %s3
  // Predicated region
  $region2: #{scalable_tanh.1} parent=0 // pred_check
    _
  $region3: #{scalable_tanh.1} parent=0 // pred_check_branch
    %8 = sbr.rel (0) target = $region5
  $region4: #{scalable_tanh.1} parent=0 // pred_region
    _
  $region5: #{scalable_tanh.1} parent=0 // pred_fallthru
    _
  // Predicated region
  $region6: #{scalable_tanh.1} parent=0 // pred_check
    _
  $region7: #{scalable_tanh.1} parent=0 // pred_check_branch
    %10 = sbr.rel (0) target = $region9
  $region8: #{scalable_tanh.1} parent=0 // pred_region
    _
  $region9: #{scalable_tanh.1} parent=0 // pred_fallthru
    _
  %v11 = vld [vmem:[%s0] sm:$0xf]
  %v12 = vld [vmem:[%s1] sm:$0x1]
  %v13 = vtanh.pop %v11
  %v15 = vlaneseq
  %v16 = vshrl.u32 %v15, 7
  %v17 = vsub.s32 0, %v16
  %v18 = vrot.slane %v12, %v17
  %v20 = vmul.f32 %v18, %v13
  %21 = vst [vmem:[%s2] sm:$0xf] %v20
  // Predicated region
  $region10: #{scalable_tanh.1} parent=0 // pred_check
    _
  $region11: #{scalable_tanh.1} parent=0 // pred_check_branch
    %23 = sbr.rel (0) target = $region13
  $region12: #{scalable_tanh.1} parent=0 // pred_region
    _
  $region13: #{scalable_tanh.1} parent=0 // pred_fallthru
    _
  // Predicated region
  $region14: #{scalable_tanh.1} parent=0 // pred_check
    _
  $region15: #{scalable_tanh.1} parent=0 // pred_check_branch
    %25 = sbr.rel (0) target = $region17
  $region16: #{scalable_tanh.1} parent=0 // pred_region
    _
  $region17: #{scalable_tanh.1} parent=0 // pred_fallthru
    _

</llo_original>
